<compile_context>
chip_gen: v5e
topology: v5e:2x2
jax: 0.10.0
libtpu: 0.0.40
codegen_flags: <defaults>
</compile_context>

<pallas_src>
import functools

import jax
import jax.numpy as jnp
from jax.experimental import pallas as pl
from jax.experimental.pallas import tpu as pltpu


def _round_up(n, m):
    return ((n + m - 1) // m) * m


def _gated_residual_kernel(k_size, dil, pad, c_in, hp, sp, cp,
                           x_ref, halo_ref, loc_ref, gb_ref,
                           w_ref, wo_ref, bo_ref,
                           skip_ref, out_ref):
    """One (batch, frame-tile) step of the WaveNet residual block."""
    xblk = x_ref[0]                                  # (tT, C_in), f32 (residual source)
    t_tile = xblk.shape[0]
    wdt = w_ref.dtype

    # Dilated causal taps built in VMEM from the single streamed copy of x plus its halo.
    if pad > 0:
        win = jnp.concatenate([halo_ref[0, 0], xblk], axis=0)      # (tT + pad, C_in)
        taps = [win[k * dil:k * dil + t_tile, :] for k in range(k_size - 1)] + [xblk]
    else:
        taps = [xblk]

    # One fused (dilated conv || local conditioning) gate matmul (tanh half || sigmoid half).
    slab = jnp.concatenate([t.astype(wdt) for t in taps]
                           + [loc_ref[0].astype(wdt)], axis=-1)    # (tT, K*C_in + L)
    pre = jnp.dot(slab, w_ref[...], preferred_element_type=jnp.float32) + gb_ref[0]

    # Gate split on the 128-aligned Hp boundary (padded lanes give tanh(0)*sigmoid(0)=0).
    h = jnp.tanh(pre[:, :hp]) * jax.nn.sigmoid(pre[:, hp:])        # (tT, Hp), f32

    # Fused skip || output 1x1 convs; split at the 128-aligned Sp boundary.
    y = jnp.dot(h.astype(wo_ref.dtype), wo_ref[...],
                preferred_element_type=jnp.float32) + bo_ref[...]  # (tT, Sp + Cp)

    skip_ref[0] = y[:, :sp].astype(skip_ref.dtype)

    res = xblk.astype(jnp.float32)                                 # exact f32 residual
    if cp > c_in:
        res = jnp.concatenate(
            [res, jnp.zeros((t_tile, cp - c_in), jnp.float32)], axis=-1)
    out_ref[0] = (y[:, sp:] + res).astype(out_ref.dtype)


def residual_conv_block1d(x, local_cond, global_cond, params,
                          *, kernel_size=3, dilation=1,
                          compute_dtype=jnp.float32, frame_tile=1024,
                          vmem_limit_bytes=None):
    """x: (B, C_in, T), local_cond: (B, L, T), global_cond: (B, G).

    Returns (output (B, C_in, T), skip (B, S, T)) — same semantics as the PyTorch
    ResidualConvBlock1d.forward with dual_head=True and causal padding.
    """
    B, C_in, T = x.shape
    L = local_cond.shape[1]
    H = params["wt"].shape[0]
    S = params["wskip"].shape[0]
    K = kernel_size
    dil = dilation
    pad = (K - 1) * dil
    f32 = jnp.float32

    Hp = _round_up(H, 128)          # 128-aligned gate halves
    Sp = _round_up(S, 128)          # lane-dense skip output
    Cp = _round_up(C_in, 128)       # lane-dense residual output
    Kc = K * C_in

    # ---- frame tiling: big tiles amortize grid-step overhead; keep >= 2 steps ----------
    tT = frame_tile if T > frame_tile else _round_up(T, 8)
    if B * pl.cdiv(T, tT) < 2 and _round_up(pl.cdiv(T, 2), 8) < T:
        tT = _round_up(pl.cdiv(T, 2), 8)    # v7x megacore: keep both TensorCores fed
    nT = pl.cdiv(T, tT)
    Tp = nT * tT

    # ---- activations: NCL -> NLC (frames on sublanes, channels on lanes) ---------------
    x_tc = jnp.transpose(x, (0, 2, 1)).astype(f32)                       # (B, T, C_in)
    loc_tc = jnp.transpose(local_cond, (0, 2, 1)).astype(compute_dtype)  # (B, T, L)
    x_main = jnp.pad(x_tc, ((0, 0), (0, Tp - T), (0, 0)))                # (B, Tp, C_in)
    loc_main = jnp.pad(loc_tc, ((0, 0), (0, Tp - T), (0, 0)))            # (B, Tp, L)

    # Per-tile causal halo: the `pad` frames immediately preceding each frame tile
    # (zeros for the first tile). Tiny vs the main stream; replaces the K x im2col.
    hf = max(pad, 1)
    if pad > 0:
        xp_full = jnp.pad(x_tc, ((0, 0), (pad, Tp - T), (0, 0)))         # (B, Tp+pad, C_in)
        idx = (jnp.arange(nT) * tT)[:, None] + jnp.arange(pad)[None, :]
        halos = jnp.take(xp_full, idx.reshape(-1), axis=1).reshape(B, nT, pad, C_in)
        halos = halos.astype(f32)
    else:
        halos = jnp.zeros((B, nT, hf, C_in), f32)

    # ---- weights: fuse (dilated || local) x (tanh || sigmoid), pad gate halves to Hp ----
    w_dil_t = jnp.transpose(params["wt"], (2, 1, 0)).reshape(Kc, H)      # (K*C_in, H)
    w_dil_s = jnp.transpose(params["ws"], (2, 1, 0)).reshape(Kc, H)
    w_tanh = jnp.concatenate([w_dil_t, params["wlt"][:, :, 0].T], axis=0)   # (Kc+L, H)
    w_sig = jnp.concatenate([w_dil_s, params["wls"][:, :, 0].T], axis=0)
    w_fused = jnp.concatenate([jnp.pad(w_tanh, ((0, 0), (0, Hp - H))),
                               jnp.pad(w_sig, ((0, 0), (0, Hp - H)))], axis=-1)  # (Kc+L, 2Hp)

    # skip || out 1x1 convs, each padded to a 128-aligned lane group
    wo = jnp.concatenate(
        [jnp.pad(params["wskip"][:, :, 0].T, ((0, Hp - H), (0, Sp - S))),
         jnp.pad(params["wout"][:, :, 0].T, ((0, Hp - H), (0, Cp - C_in)))],
        axis=-1)                                                         # (Hp, Sp+Cp)
    bo = jnp.concatenate([jnp.pad(params["bskip"], (0, Sp - S)),
                          jnp.pad(params["bout"], (0, Cp - C_in))]
                         ).reshape(1, -1).astype(f32)                    # (1, Sp+Cp)

    # Global conditioning + all pre-activation biases folded into a per-batch gate bias.
    gc = global_cond.astype(f32)
    g_tanh = jnp.dot(gc, params["wgt"][:, :, 0].T, precision=jax.lax.Precision.HIGHEST) \
        + (params["bt"] + params["blt"] + params["bgt"])                 # (B, H)
    g_sig = jnp.dot(gc, params["wgs"][:, :, 0].T, precision=jax.lax.Precision.HIGHEST) \
        + (params["bs"] + params["bls"] + params["bgs"])
    g_bias = jnp.concatenate([jnp.pad(g_tanh, ((0, 0), (0, Hp - H))),
                              jnp.pad(g_sig, ((0, 0), (0, Hp - H)))],
                             axis=-1)[:, None, :].astype(f32)            # (B, 1, 2Hp)

    # compute dtype for MXU operands / streaming local conditioning (f32 default).
    w_fused = w_fused.astype(compute_dtype)
    wo = wo.astype(compute_dtype)

    kernel = functools.partial(_gated_residual_kernel, K, dil, pad, C_in, Hp, Sp, Cp)

    itemsize = jnp.dtype(compute_dtype).itemsize
    cost = pl.CostEstimate(
        flops=2 * B * Tp * ((Kc + L) * 2 * Hp + Hp * (Sp + Cp)),
        transcendentals=2 * B * Tp * Hp,
        bytes_accessed=(x_main.size + halos.size + g_bias.size + bo.size) * 4
        + (loc_main.size + w_fused.size + wo.size) * itemsize
        + B * Tp * (Sp + Cp) * 4,
    )

    in_specs = [
        pl.BlockSpec((1, tT, C_in), lambda b, j: (b, j, 0)),           # x (f32, 1x stream)
        pl.BlockSpec((1, 1, hf, C_in), lambda b, j: (b, j, 0, 0)),     # causal halo
        pl.BlockSpec((1, tT, L), lambda b, j: (b, j, 0)),              # local conditioning
        pl.BlockSpec((1, 1, 2 * Hp), lambda b, j: (b, 0, 0)),          # per-batch gate bias
        pl.BlockSpec((Kc + L, 2 * Hp), lambda b, j: (0, 0)),           # fused gate weight
        pl.BlockSpec((Hp, Sp + Cp), lambda b, j: (0, 0)),              # fused skip||out weight
        pl.BlockSpec((1, Sp + Cp), lambda b, j: (0, 0)),               # fused skip||out bias
    ]
    out_specs = [
        pl.BlockSpec((1, tT, Sp), lambda b, j: (b, j, 0)),             # skip (lane-dense)
        pl.BlockSpec((1, tT, Cp), lambda b, j: (b, j, 0)),             # residual out (lane-dense)
    ]

    skip_p, out_p = pl.pallas_call(
        kernel,
        out_shape=(jax.ShapeDtypeStruct((B, Tp, Sp), f32),
                   jax.ShapeDtypeStruct((B, Tp, Cp), f32)),
        grid_spec=pltpu.PrefetchScalarGridSpec(
            num_scalar_prefetch=0,
            grid=(B, nT),
            in_specs=in_specs,
            out_specs=out_specs,
        ),
        compiler_params=pltpu.CompilerParams(
            dimension_semantics=("parallel", "parallel"),
            vmem_limit_bytes=vmem_limit_bytes),
        cost_estimate=cost,
    )(x_main, halos, loc_main, g_bias, w_fused, wo, bo)

    skip = jnp.transpose(skip_p[:, :T, :S], (0, 2, 1))     # (B, S, T)
    out = jnp.transpose(out_p[:, :T, :C_in], (0, 2, 1))    # (B, C_in, T)
    return out, skip


# ---------------------------------------------------------------------------
# parameter init (weight-norm parameterization: w = g * v / ||v||, dim=0)
# ---------------------------------------------------------------------------
def _weight_norm_init(key, shape):
    kv, kg = jax.random.split(key)
    v = jax.random.normal(kv, shape, jnp.float32) * 0.2
    g = jax.random.uniform(kg, (shape[0],), jnp.float32, minval=0.5, maxval=1.5)
    norm = jnp.sqrt(jnp.sum(v * v, axis=tuple(range(1, v.ndim)), keepdims=True))
    return g.reshape((-1,) + (1,) * (v.ndim - 1)) * v / norm


def make_params(key, in_channels, hidden, skip, local_ch, global_ch, kernel_size):
    keys = jax.random.split(key, 20)
    p = {}
    p["wt"] = _weight_norm_init(keys[0], (hidden, in_channels, kernel_size))
    p["ws"] = _weight_norm_init(keys[1], (hidden, in_channels, kernel_size))
    p["wlt"] = _weight_norm_init(keys[2], (hidden, local_ch, 1))
    p["wls"] = _weight_norm_init(keys[3], (hidden, local_ch, 1))
    p["wgt"] = _weight_norm_init(keys[4], (hidden, global_ch, 1))
    p["wgs"] = _weight_norm_init(keys[5], (hidden, global_ch, 1))
    p["wskip"] = _weight_norm_init(keys[6], (skip, hidden, 1))
    p["wout"] = _weight_norm_init(keys[7], (in_channels, hidden, 1))
    p["bt"] = jax.random.normal(keys[8], (hidden,), jnp.float32) * 0.05
    p["bs"] = jax.random.normal(keys[9], (hidden,), jnp.float32) * 0.05
    p["blt"] = jax.random.normal(keys[10], (hidden,), jnp.float32) * 0.05
    p["bls"] = jax.random.normal(keys[11], (hidden,), jnp.float32) * 0.05
    p["bgt"] = jax.random.normal(keys[12], (hidden,), jnp.float32) * 0.05
    p["bgs"] = jax.random.normal(keys[13], (hidden,), jnp.float32) * 0.05
    p["bskip"] = jax.random.normal(keys[14], (skip,), jnp.float32) * 0.05
    p["bout"] = jax.random.normal(keys[15], (in_channels,), jnp.float32) * 0.05
    return p


# ---------------------------------------------------------------------------
# pure-JAX reference (mirrors the PyTorch forward) for correctness checking
# ---------------------------------------------------------------------------
def reference(x, local_cond, global_cond, p, *, kernel_size, dilation):
    pad = (kernel_size - 1) * dilation

    def conv1d(inp, w, b, dil):
        out = jax.lax.conv_general_dilated(
            inp, w, window_strides=(1,), padding="VALID",
            rhs_dilation=(dil,), dimension_numbers=("NCH", "OIH", "NCH"))
        return out + b[None, :, None]

    xp = jnp.pad(x, ((0, 0), (0, 0), (pad, 0)))
    pre_t = conv1d(xp, p["wt"], p["bt"], dilation)
    pre_s = conv1d(xp, p["ws"], p["bs"], dilation)
    pre_t = pre_t + conv1d(local_cond, p["wlt"], p["blt"], 1)
    pre_s = pre_s + conv1d(local_cond, p["wls"], p["bls"], 1)
    g = global_cond[:, :, None]
    pre_t = pre_t + conv1d(g, p["wgt"], p["bgt"], 1)
    pre_s = pre_s + conv1d(g, p["wgs"], p["bgs"], 1)
    h = jnp.tanh(pre_t) * jax.nn.sigmoid(pre_s)
    skip = conv1d(h, p["wskip"], p["bskip"], 1)
    out = x + conv1d(h, p["wout"], p["bout"], 1)
    return out, skip


if __name__ == "__main__":
    B, C_in, H, S, L, G, T = 2, 4, 8, 6, 3, 5, 16
    K, DIL = 3, 2

    key = jax.random.PRNGKey(0)
    kx, kl, kg, kp = jax.random.split(key, 4)
    x = jax.random.normal(kx, (B, C_in, T), jnp.float32)
    local_cond = jax.random.normal(kl, (B, L, T), jnp.float32)
    global_cond = jax.random.normal(kg, (B, G), jnp.float32)
    params = make_params(kp, C_in, H, S, L, G, K)

    out, skip = residual_conv_block1d(x, local_cond, global_cond, params,
                                      kernel_size=K, dilation=DIL)
    out = jax.block_until_ready(out)
    skip = jax.block_until_ready(skip)

    out_ref, skip_ref = reference(x, local_cond, global_cond, params,
                                  kernel_size=K, dilation=DIL)
    assert out.shape == (B, C_in, T) and skip.shape == (B, S, T)
    assert jnp.allclose(out, out_ref, atol=1e-5, rtol=1e-5)
    assert jnp.allclose(skip, skip_ref, atol=1e-5, rtol=1e-5)

    print("KERNEL_OK")
</pallas_src>

<mosaic_0001>
module attributes {stable_mosaic.version = 11 : i64} {
  func.func @_gated_residual_kernel(%arg0: i32, %arg1: i32, %arg2: memref<1x16x4xf32, #tpu.memory_space<vmem>>, %arg3: memref<1x1x4x4xf32, #tpu.memory_space<vmem>>, %arg4: memref<1x16x3xf32, #tpu.memory_space<vmem>>, %arg5: memref<1x1x256xf32, #tpu.memory_space<vmem>>, %arg6: memref<15x256xf32, #tpu.memory_space<vmem>>, %arg7: memref<128x256xf32, #tpu.memory_space<vmem>>, %arg8: memref<1x256xf32, #tpu.memory_space<vmem>>, %arg9: memref<1x16x128xf32, #tpu.memory_space<vmem>>, %arg10: memref<1x16x128xf32, #tpu.memory_space<vmem>>) attributes {dimension_semantics = [#tpu.dimension_semantics<parallel>, #tpu.dimension_semantics<parallel>], iteration_bounds = array<i64: 2, 1>, scalar_prefetch = 0 : i64, scratch_operands = 0 : i64, tpu.core_type = #tpu.core_type<tc>, window_params = [{transform_indices = @transform_0, window_bounds = array<i64: 1, 16, 4>}, {transform_indices = @transform_1, window_bounds = array<i64: 1, 1, 4, 4>}, {transform_indices = @transform_2, window_bounds = array<i64: 1, 16, 3>}, {transform_indices = @transform_3, window_bounds = array<i64: 1, 1, 256>}, {pipeline_mode = #tpu.pipeline_mode<synchronous>, transform_indices = @transform_4, window_bounds = array<i64: 15, 256>}, {pipeline_mode = #tpu.pipeline_mode<synchronous>, transform_indices = @transform_5, window_bounds = array<i64: 128, 256>}, {pipeline_mode = #tpu.pipeline_mode<synchronous>, transform_indices = @transform_6, window_bounds = array<i64: 1, 256>}, {transform_indices = @transform_7, window_bounds = array<i64: 1, 16, 128>}, {transform_indices = @transform_8, window_bounds = array<i64: 1, 16, 128>}]} {
    %c0 = arith.constant 0 : index
    %c0_0 = arith.constant 0 : index
    %c0_1 = arith.constant 0 : index
    %0 = vector.load %arg2[%c0, %c0_0, %c0_1] : memref<1x16x4xf32, #tpu.memory_space<vmem>>, vector<1x16x4xf32>
    %1 = vector.shape_cast %0 : vector<1x16x4xf32> to vector<16x4xf32>
    %c0_2 = arith.constant 0 : index
    %c0_3 = arith.constant 0 : index
    %c0_4 = arith.constant 0 : index
    %c0_5 = arith.constant 0 : index
    %2 = vector.load %arg3[%c0_2, %c0_3, %c0_4, %c0_5] : memref<1x1x4x4xf32, #tpu.memory_space<vmem>>, vector<1x1x4x4xf32>
    %3 = vector.shape_cast %2 : vector<1x1x4x4xf32> to vector<4x4xf32>
    %4 = tpu.concatenate %3, %1 in 0 : vector<4x4xf32>, vector<16x4xf32> -> vector<20x4xf32>
    %5 = vector.extract_strided_slice %4 {offsets = [0, 0], sizes = [16, 4], strides = [1, 1]} : vector<20x4xf32> to vector<16x4xf32>
    %6 = vector.extract_strided_slice %4 {offsets = [2, 0], sizes = [16, 4], strides = [1, 1]} : vector<20x4xf32> to vector<16x4xf32>
    %c0_6 = arith.constant 0 : index
    %c0_7 = arith.constant 0 : index
    %c0_8 = arith.constant 0 : index
    %7 = vector.load %arg4[%c0_6, %c0_7, %c0_8] : memref<1x16x3xf32, #tpu.memory_space<vmem>>, vector<1x16x3xf32>
    %8 = vector.shape_cast %7 : vector<1x16x3xf32> to vector<16x3xf32>
    %9 = tpu.concatenate %5, %6, %1, %8 in 1 : vector<16x4xf32>, vector<16x4xf32>, vector<16x4xf32>, vector<16x3xf32> -> vector<16x15xf32>
    %c0_9 = arith.constant 0 : index
    %c0_10 = arith.constant 0 : index
    %10 = vector.load %arg6[%c0_9, %c0_10] : memref<15x256xf32, #tpu.memory_space<vmem>>, vector<15x256xf32>
    %cst = arith.constant dense<0.000000e+00> : vector<16x256xf32>
    %11 = tpu.matmul %9, %10, %cst {dimension_numbers = #tpu.dot_dimension_numbers<[1], [0], [0], [1], [0, 0, 1, 1], [], []>} : vector<16x15xf32>, vector<15x256xf32>, vector<16x256xf32> -> vector<16x256xf32>
    %c0_11 = arith.constant 0 : index
    %c0_12 = arith.constant 0 : index
    %c0_13 = arith.constant 0 : index
    %12 = vector.load %arg5[%c0_11, %c0_12, %c0_13] : memref<1x1x256xf32, #tpu.memory_space<vmem>>, vector<1x1x256xf32>
    %13 = vector.shape_cast %12 : vector<1x1x256xf32> to vector<1x256xf32>
    %14 = vector.broadcast %13 : vector<1x256xf32> to vector<16x256xf32>
    %15 = arith.addf %11, %14 : vector<16x256xf32>
    %16 = vector.extract_strided_slice %15 {offsets = [0, 0], sizes = [16, 128], strides = [1, 1]} : vector<16x256xf32> to vector<16x128xf32>
    %17 = math.tanh %16 : vector<16x128xf32>
    %18 = vector.extract_strided_slice %15 {offsets = [0, 128], sizes = [16, 128], strides = [1, 1]} : vector<16x256xf32> to vector<16x128xf32>
    %19 = arith.negf %18 : vector<16x128xf32>
    %20 = math.exp %19 : vector<16x128xf32>
    %cst_14 = arith.constant 1.000000e+00 : f32
    %21 = vector.broadcast %cst_14 : f32 to vector<16x128xf32>
    %22 = arith.addf %21, %20 : vector<16x128xf32>
    %23 = arith.divf %21, %22 : vector<16x128xf32>
    %24 = arith.mulf %17, %23 : vector<16x128xf32>
    %c0_15 = arith.constant 0 : index
    %c0_16 = arith.constant 0 : index
    %25 = vector.load %arg7[%c0_15, %c0_16] : memref<128x256xf32, #tpu.memory_space<vmem>>, vector<128x256xf32>
    %cst_17 = arith.constant dense<0.000000e+00> : vector<16x256xf32>
    %26 = tpu.matmul %24, %25, %cst_17 {dimension_numbers = #tpu.dot_dimension_numbers<[1], [0], [0], [1], [0, 0, 1, 1], [], []>} : vector<16x128xf32>, vector<128x256xf32>, vector<16x256xf32> -> vector<16x256xf32>
    %c0_18 = arith.constant 0 : index
    %c0_19 = arith.constant 0 : index
    %27 = vector.load %arg8[%c0_18, %c0_19] : memref<1x256xf32, #tpu.memory_space<vmem>>, vector<1x256xf32>
    %28 = vector.broadcast %27 : vector<1x256xf32> to vector<16x256xf32>
    %29 = arith.addf %26, %28 : vector<16x256xf32>
    %30 = vector.extract_strided_slice %29 {offsets = [0, 0], sizes = [16, 128], strides = [1, 1]} : vector<16x256xf32> to vector<16x128xf32>
    %c0_20 = arith.constant 0 : index
    %c0_21 = arith.constant 0 : index
    %c0_22 = arith.constant 0 : index
    %31 = vector.load %arg9[%c0_20, %c0_21, %c0_22] : memref<1x16x128xf32, #tpu.memory_space<vmem>>, vector<1x16x128xf32>
    %32 = vector.shape_cast %31 : vector<1x16x128xf32> to vector<16x128xf32>
    %33 = vector.shape_cast %30 : vector<16x128xf32> to vector<1x16x128xf32>
    tpu.vector_store %arg9[%c0_20, %c0_21, %c0_22], %33 {strides = array<i32>} : memref<1x16x128xf32, #tpu.memory_space<vmem>>, vector<1x16x128xf32>,
    %cst_23 = arith.constant 0.000000e+00 : f32
    %34 = vector.broadcast %cst_23 : f32 to vector<16x124xf32>
    %35 = tpu.concatenate %1, %34 in 1 : vector<16x4xf32>, vector<16x124xf32> -> vector<16x128xf32>
    %36 = vector.extract_strided_slice %29 {offsets = [0, 128], sizes = [16, 128], strides = [1, 1]} : vector<16x256xf32> to vector<16x128xf32>
    %37 = arith.addf %36, %35 : vector<16x128xf32>
    %c0_24 = arith.constant 0 : index
    %c0_25 = arith.constant 0 : index
    %c0_26 = arith.constant 0 : index
    %38 = vector.load %arg10[%c0_24, %c0_25, %c0_26] : memref<1x16x128xf32, #tpu.memory_space<vmem>>, vector<1x16x128xf32>
    %39 = vector.shape_cast %38 : vector<1x16x128xf32> to vector<16x128xf32>
    %40 = vector.shape_cast %37 : vector<16x128xf32> to vector<1x16x128xf32>
    tpu.vector_store %arg10[%c0_24, %c0_25, %c0_26], %40 {strides = array<i32>} : memref<1x16x128xf32, #tpu.memory_space<vmem>>, vector<1x16x128xf32>,
    return
  }
  func.func @transform_0(%arg0: i32, %arg1: i32) -> (i32, i32, i32) {
    %c0_i32 = arith.constant 0 : i32
    %c0_i32_0 = arith.constant 0 : i32
    return %arg0, %arg1, %c0_i32 : i32, i32, i32
  }
  func.func @transform_1(%arg0: i32, %arg1: i32) -> (i32, i32, i32, i32) {
    %c0_i32 = arith.constant 0 : i32
    %c0_i32_0 = arith.constant 0 : i32
    %c0_i32_1 = arith.constant 0 : i32
    return %arg0, %arg1, %c0_i32, %c0_i32_0 : i32, i32, i32, i32
  }
  func.func @transform_2(%arg0: i32, %arg1: i32) -> (i32, i32, i32) {
    %c0_i32 = arith.constant 0 : i32
    %c0_i32_0 = arith.constant 0 : i32
    return %arg0, %arg1, %c0_i32 : i32, i32, i32
  }
  func.func @transform_3(%arg0: i32, %arg1: i32) -> (i32, i32, i32) {
    %c0_i32 = arith.constant 0 : i32
    %c0_i32_0 = arith.constant 0 : i32
    %c0_i32_1 = arith.constant 0 : i32
    return %arg0, %c0_i32, %c0_i32_0 : i32, i32, i32
  }
  func.func @transform_4(%arg0: i32, %arg1: i32) -> (i32, i32) {
    %c0_i32 = arith.constant 0 : i32
    %c0_i32_0 = arith.constant 0 : i32
    %c0_i32_1 = arith.constant 0 : i32
    return %c0_i32, %c0_i32_0 : i32, i32
  }
  func.func @transform_5(%arg0: i32, %arg1: i32) -> (i32, i32) {
    %c0_i32 = arith.constant 0 : i32
    %c0_i32_0 = arith.constant 0 : i32
    %c0_i32_1 = arith.constant 0 : i32
    return %c0_i32, %c0_i32_0 : i32, i32
  }
  func.func @transform_6(%arg0: i32, %arg1: i32) -> (i32, i32) {
    %c0_i32 = arith.constant 0 : i32
    %c0_i32_0 = arith.constant 0 : i32
    %c0_i32_1 = arith.constant 0 : i32
    return %c0_i32, %c0_i32_0 : i32, i32
  }
  func.func @transform_7(%arg0: i32, %arg1: i32) -> (i32, i32, i32) {
    %c0_i32 = arith.constant 0 : i32
    %c0_i32_0 = arith.constant 0 : i32
    return %arg0, %arg1, %c0_i32 : i32, i32, i32
  }
  func.func @transform_8(%arg0: i32, %arg1: i32) -> (i32, i32, i32) {
    %c0_i32 = arith.constant 0 : i32
    %c0_i32_0 = arith.constant 0 : i32
    return %arg0, %arg1, %c0_i32 : i32, i32, i32
  }
}

</mosaic_0001>

<llo_original>
// kernel: tpu_custom_call.1
$region0: #{tpu_custom_call.1}
  #allocation0 [shape = 'u32[]', space=smem, size = 0x4, offset = 0x4, fixed_abs, tag = 'smem constant byte address 0x4 - core index']
  #allocation1 [shape = 'u32[72,128]{1,0:T(1,128)}', space=vmem, size = 0x9000, scoped, tag = 'internal scratch']
  %s0 = inlined_call_operand.vmem [shape: f32[2,16,4], index: 0, kind: input, shape index: {}]
  %s1 = inlined_call_operand.vmem [shape: f32[2,1,4,4], index: 1, kind: input, shape index: {}]
  %s2 = inlined_call_operand.vmem [shape: f32[2,16,3], index: 2, kind: input, shape index: {}]
  %s3 = inlined_call_operand.vmem [shape: f32[2,1,256], index: 3, kind: input, shape index: {}]
  %s4 = inlined_call_operand.vmem [shape: f32[15,256], index: 4, kind: input, shape index: {}]
  %s5 = inlined_call_operand.hbm [shape: f32[128,256], index: 5, kind: input, shape index: {}]
  %s6 = inlined_call_operand.vmem [shape: f32[1,256], index: 6, kind: input, shape index: {}]
  %s7 = inlined_call_operand.hbm [shape: f32[2,16,128], index: 7, kind: output, shape index: {0}]
  %s8 = inlined_call_operand.hbm [shape: f32[2,16,128], index: 8, kind: output, shape index: {1}]
  %9 = xla_tuple %s7, %s8
  %s10 = sld [smem:[#allocation0]]
  $region73: #{tpu_custom_call.1} parent=0
    _
  %s12 = ssub.s32 1, %s10
  %s13 = scalar_select 0, %s12, %s10
  $region1: #{tpu_custom_call.1} parent=0
    #allocation2 [shape = 'u8[131072]{0}', space=vmem, size = 0x20000, scoped, tag = 'input window, operand 5, single buffered']
    #allocation3 [shape = 's32[2]{0}', space=sflag, size = 0x8, scoped, tag = 'scoped memory for tpu_custom_call.1']
    #allocation4 [shape = 's32[2]{0}', space=sflag, size = 0x8, scoped, tag = 'scoped memory for tpu_custom_call.1']
    #allocation5 [shape = 'u8[16384]{0}', space=vmem, size = 0x4000, scoped, tag = 'output window, operand 0']
    #allocation6 [shape = 'u8[16384]{0}', space=vmem, size = 0x4000, scoped, tag = 'output window, operand 1']
    #allocation7 [shape = 's32[2]{0}', space=sflag, size = 0x8, scoped, tag = 'scoped memory for tpu_custom_call.1']
    %14 = vsyncpa [#allocation3], 0
    %15 = vsyncpa [#allocation4], 0
    %s16 = scalar_lea.sflag [#allocation4], 1
    %17 = vsyncpa %s16, 0
    %18 = vsyncpa [#allocation7], 0
    %s19 = scalar_lea.sflag [#allocation7], 1
    %20 = vsyncpa %s19, 0
    loop: start=0, step=1, limit=4
    $region2: #{tpu_custom_call.1} parent=1 // loop_pre_header
      _
    $region3: #{tpu_custom_call.1} parent=1 // loop_header
      %s22 = sphi 0, %s26
      %p23 = scmp.ge.s32.totalorder %s22, 4
      %s29 = sphi 0, %s41
      %s30 = sphi 0, %s37
      %s31 = sphi 0, %s29
      %s32 = sphi 0, %s30
      %s33 = sphi 0, %s31
      %s34 = sphi 0, %s32
      %s46 = sphi 0, %s48
      %s49 = sphi 0, %s46
      %s50 = sphi 0, %s49
      %s66 = sphi 0, %s50
      %s74 = sphi 0, %s76
      %s77 = sphi 0, %s74
      %s78 = sphi 0, %s77
      %s94 = sphi 0, %s78
      %s102 = sphi 0, %s104
      %s105 = sphi 0, %s102
      %s106 = sphi 0, %s105
      %s122 = sphi 0, %s106
      %s128 = sphi 0, %s130
      %s131 = sphi 0, %s128
      %s132 = sphi 0, %s131
      %s148 = sphi 0, %s132
      %s152 = sphi 0, %s152
      %s154 = sphi 0, %s152
      %s155 = sphi 0, %s154
      %s169 = sphi 0, %s155
      %s173 = sphi 0, %s173
      %s175 = sphi 0, %s173
      %s176 = sphi 0, %s175
      %s190 = sphi 0, %s176
      %s194 = sphi 0, %s194
      %s196 = sphi 0, %s194
      %s197 = sphi 0, %s196
      %s211 = sphi 0, %s197
      %s219 = sphi 0, %s221
      %s222 = sphi 0, %s219
      %s223 = sphi 0, %s222
      %s239 = sphi 0, %s223
      %s247 = sphi 0, %s249
      %s250 = sphi 0, %s247
      %s251 = sphi 0, %s250
      %s267 = sphi 0, %s251
    $region4: #{tpu_custom_call.1} parent=1 // loop_header_branch
      %25 = sbr.rel (%p23) target = $region8
    $region5: #{tpu_custom_call.1} parent=1 // loop_body
      %s27 = ssub.s32 %s22, 1
      %s28 = ssub.s32 %s22, 2
      %s35 = sadd.s32 1, %s30
      %p36 = scmp.ge.s32.totalorder %s35, 1
      %s37 = scalar_select %p36, 0, %s35
      %s38 = sadd.s32 1, %s29
      %s39 = scalar_select %p36, %s38, %s29
      %p40 = scmp.ge.s32.totalorder %s39, 2
      %s41 = scalar_select %p40, 0, %s39
      %s42 = ssub.s32 %s29, %s41
      %s43 = ssub.s32 %s30, %s37
      %s44 = sor.u32 %s42, %s43
      %p45 = scmp.eq.s32.totalorder %s44, 0
      %s47 = sadd.s32 %s46, 1
      %s48 = scalar_select %p45, %s46, %s47
      %p51 = pneg %p45
      %p52 = scmp.eq.s32.totalorder %s22, 1
      %p53 = por %p51, %p52
      %p54 = scmp.ne.s32.totalorder %s46, %s49
      %p55 = scmp.eq.s32.totalorder %s22, 0
      %p56 = por %p54, %p55
      %p57 = scmp.ne.s32.totalorder %s46, %s49
      %p58 = scmp.eq.s32.totalorder %s27, 1
      %p59 = por %p57, %p58
      %p60 = scmp.ne.s32.totalorder %s49, %s50
      %p61 = scmp.eq.s32.totalorder %s27, 0
      %p62 = por %p60, %p61
      %p63 = scmp.ne.s32.totalorder %s49, %s50
      %p64 = scmp.eq.s32.totalorder %s28, 1
      %p65 = por %p63, %p64
      %p67 = scmp.ne.s32.totalorder %s50, %s66
      %p68 = scmp.eq.s32.totalorder %s28, 0
      %p69 = por %p67, %p68
      %s70 = ssub.s32 %s29, %s41
      %s71 = ssub.s32 %s30, %s37
      %s72 = sor.u32 %s70, %s71
      %p73 = scmp.eq.s32.totalorder %s72, 0
      %s75 = sadd.s32 %s74, 1
      %s76 = scalar_select %p73, %s74, %s75
      %p79 = pneg %p73
      %p80 = scmp.eq.s32.totalorder %s22, 1
      %p81 = por %p79, %p80
      %p82 = scmp.ne.s32.totalorder %s74, %s77
      %p83 = scmp.eq.s32.totalorder %s22, 0
      %p84 = por %p82, %p83
      %p85 = scmp.ne.s32.totalorder %s74, %s77
      %p86 = scmp.eq.s32.totalorder %s27, 1
      %p87 = por %p85, %p86
      %p88 = scmp.ne.s32.totalorder %s77, %s78
      %p89 = scmp.eq.s32.totalorder %s27, 0
      %p90 = por %p88, %p89
      %p91 = scmp.ne.s32.totalorder %s77, %s78
      %p92 = scmp.eq.s32.totalorder %s28, 1
      %p93 = por %p91, %p92
      %p95 = scmp.ne.s32.totalorder %s78, %s94
      %p96 = scmp.eq.s32.totalorder %s28, 0
      %p97 = por %p95, %p96
      %s98 = ssub.s32 %s29, %s41
      %s99 = ssub.s32 %s30, %s37
      %s100 = sor.u32 %s98, %s99
      %p101 = scmp.eq.s32.totalorder %s100, 0
      %s103 = sadd.s32 %s102, 1
      %s104 = scalar_select %p101, %s102, %s103
      %p107 = pneg %p101
      %p108 = scmp.eq.s32.totalorder %s22, 1
      %p109 = por %p107, %p108
      %p110 = scmp.ne.s32.totalorder %s102, %s105
      %p111 = scmp.eq.s32.totalorder %s22, 0
      %p112 = por %p110, %p111
      %p113 = scmp.ne.s32.totalorder %s102, %s105
      %p114 = scmp.eq.s32.totalorder %s27, 1
      %p115 = por %p113, %p114
      %p116 = scmp.ne.s32.totalorder %s105, %s106
      %p117 = scmp.eq.s32.totalorder %s27, 0
      %p118 = por %p116, %p117
      %p119 = scmp.ne.s32.totalorder %s105, %s106
      %p120 = scmp.eq.s32.totalorder %s28, 1
      %p121 = por %p119, %p120
      %p123 = scmp.ne.s32.totalorder %s106, %s122
      %p124 = scmp.eq.s32.totalorder %s28, 0
      %p125 = por %p123, %p124
      %s126 = ssub.s32 %s29, %s41
      %p127 = scmp.eq.s32.totalorder %s126, 0
      %s129 = sadd.s32 %s128, 1
      %s130 = scalar_select %p127, %s128, %s129
      %p133 = pneg %p127
      %p134 = scmp.eq.s32.totalorder %s22, 1
      %p135 = por %p133, %p134
      %p136 = scmp.ne.s32.totalorder %s128, %s131
      %p137 = scmp.eq.s32.totalorder %s22, 0
      %p138 = por %p136, %p137
      %p139 = scmp.ne.s32.totalorder %s128, %s131
      %p140 = scmp.eq.s32.totalorder %s27, 1
      %p141 = por %p139, %p140
      %p142 = scmp.ne.s32.totalorder %s131, %s132
      %p143 = scmp.eq.s32.totalorder %s27, 0
      %p144 = por %p142, %p143
      %p145 = scmp.ne.s32.totalorder %s131, %s132
      %p146 = scmp.eq.s32.totalorder %s28, 1
      %p147 = por %p145, %p146
      %p149 = scmp.ne.s32.totalorder %s132, %s148
      %p150 = scmp.eq.s32.totalorder %s28, 0
      %p151 = por %p149, %p150
      %s153 = sadd.s32 %s152, 1
      %p156 = scmp.eq.s32.totalorder %s22, 1
      %p157 = scmp.ne.s32.totalorder %s152, %s154
      %p158 = scmp.eq.s32.totalorder %s22, 0
      %p159 = por %p157, %p158
      %p160 = scmp.ne.s32.totalorder %s152, %s154
      %p161 = scmp.eq.s32.totalorder %s27, 1
      %p162 = por %p160, %p161
      %p163 = scmp.ne.s32.totalorder %s154, %s155
      %p164 = scmp.eq.s32.totalorder %s27, 0
      %p165 = por %p163, %p164
      %p166 = scmp.ne.s32.totalorder %s154, %s155
      %p167 = scmp.eq.s32.totalorder %s28, 1
      %p168 = por %p166, %p167
      %p170 = scmp.ne.s32.totalorder %s155, %s169
      %p171 = scmp.eq.s32.totalorder %s28, 0
      %p172 = por %p170, %p171
      %s174 = sadd.s32 %s173, 1
      %p177 = scmp.eq.s32.totalorder %s22, 1
      %p178 = scmp.ne.s32.totalorder %s173, %s175
      %p179 = scmp.eq.s32.totalorder %s22, 0
      %p180 = por %p178, %p179
      %p181 = scmp.ne.s32.totalorder %s173, %s175
      %p182 = scmp.eq.s32.totalorder %s27, 1
      %p183 = por %p181, %p182
      %p184 = scmp.ne.s32.totalorder %s175, %s176
      %p185 = scmp.eq.s32.totalorder %s27, 0
      %p186 = por %p184, %p185
      %p187 = scmp.ne.s32.totalorder %s175, %s176
      %p188 = scmp.eq.s32.totalorder %s28, 1
      %p189 = por %p187, %p188
      %p191 = scmp.ne.s32.totalorder %s176, %s190
      %p192 = scmp.eq.s32.totalorder %s28, 0
      %p193 = por %p191, %p192
      %s195 = sadd.s32 %s194, 1
      %p198 = scmp.eq.s32.totalorder %s22, 1
      %p199 = scmp.ne.s32.totalorder %s194, %s196
      %p200 = scmp.eq.s32.totalorder %s22, 0
      %p201 = por %p199, %p200
      %p202 = scmp.ne.s32.totalorder %s194, %s196
      %p203 = scmp.eq.s32.totalorder %s27, 1
      %p204 = por %p202, %p203
      %p205 = scmp.ne.s32.totalorder %s196, %s197
      %p206 = scmp.eq.s32.totalorder %s27, 0
      %p207 = por %p205, %p206
      %p208 = scmp.ne.s32.totalorder %s196, %s197
      %p209 = scmp.eq.s32.totalorder %s28, 1
      %p210 = por %p208, %p209
      %p212 = scmp.ne.s32.totalorder %s197, %s211
      %p213 = scmp.eq.s32.totalorder %s28, 0
      %p214 = por %p212, %p213
      %s215 = ssub.s32 %s29, %s41
      %s216 = ssub.s32 %s30, %s37
      %s217 = sor.u32 %s215, %s216
      %p218 = scmp.eq.s32.totalorder %s217, 0
      %s220 = sadd.s32 %s219, 1
      %s221 = scalar_select %p218, %s219, %s220
      %p224 = pneg %p218
      %p225 = scmp.eq.s32.totalorder %s22, 1
      %p226 = por %p224, %p225
      %p227 = scmp.ne.s32.totalorder %s219, %s222
      %p228 = scmp.eq.s32.totalorder %s22, 0
      %p229 = por %p227, %p228
      %p230 = scmp.ne.s32.totalorder %s219, %s222
      %p231 = scmp.eq.s32.totalorder %s27, 1
      %p232 = por %p230, %p231
      %p233 = scmp.ne.s32.totalorder %s222, %s223
      %p234 = scmp.eq.s32.totalorder %s27, 0
      %p235 = por %p233, %p234
      %p236 = scmp.ne.s32.totalorder %s222, %s223
      %p237 = scmp.eq.s32.totalorder %s28, 1
      %p238 = por %p236, %p237
      %p240 = scmp.ne.s32.totalorder %s223, %s239
      %p241 = scmp.eq.s32.totalorder %s28, 0
      %p242 = por %p240, %p241
      %s243 = ssub.s32 %s29, %s41
      %s244 = ssub.s32 %s30, %s37
      %s245 = sor.u32 %s243, %s244
      %p246 = scmp.eq.s32.totalorder %s245, 0
      %s248 = sadd.s32 %s247, 1
      %s249 = scalar_select %p246, %s247, %s248
      %p252 = pneg %p246
      %p253 = scmp.eq.s32.totalorder %s22, 1
      %p254 = por %p252, %p253
      %p255 = scmp.ne.s32.totalorder %s247, %s250
      %p256 = scmp.eq.s32.totalorder %s22, 0
      %p257 = por %p255, %p256
      %p258 = scmp.ne.s32.totalorder %s247, %s250
      %p259 = scmp.eq.s32.totalorder %s27, 1
      %p260 = por %p258, %p259
      %p261 = scmp.ne.s32.totalorder %s250, %s251
      %p262 = scmp.eq.s32.totalorder %s27, 0
      %p263 = por %p261, %p262
      %p264 = scmp.ne.s32.totalorder %s250, %s251
      %p265 = scmp.eq.s32.totalorder %s28, 1
      %p266 = por %p264, %p265
      %p268 = scmp.ne.s32.totalorder %s251, %s267
      %p269 = scmp.eq.s32.totalorder %s28, 0
      %p270 = por %p268, %p269
      %p271 = scmp.le.s32.totalorder 1, %s22
      %p272 = scmp.lt.s32.totalorder %s22, 3
      %p273 = pnand %p271, %p272
      %p274 = pneg %p273
      // Predicated region
      $region9: #{tpu_custom_call.1} parent=5 // pred_check
        _
      $region10: #{tpu_custom_call.1} parent=5 // pred_check_branch
        %276 = sbr.rel (%p273) target = $region12
      $region11: #{tpu_custom_call.1} parent=5 // pred_region
        %s277 = ssub.s32 %s22, 1
        // Predicated region
        $region13: #{tpu_custom_call.1} parent=11 // pred_check
          %p278 = pneg %p165
        $region14: #{tpu_custom_call.1} parent=11 // pred_check_branch
          %280 = sbr.rel (%p278) target = $region16
        $region15: #{tpu_custom_call.1} parent=11 // pred_region
          _
        $region16: #{tpu_custom_call.1} parent=11 // pred_fallthru
          _
        // Predicated region
        $region17: #{tpu_custom_call.1} parent=11 // pred_check
          %p281 = pneg %p186
        $region18: #{tpu_custom_call.1} parent=11 // pred_check_branch
          %283 = sbr.rel (%p281) target = $region20
        $region19: #{tpu_custom_call.1} parent=11 // pred_region
          %285 = vsyncadd [#allocation3], 0
          %s286 = sshll.u32 %s5, 4
          %s287 = int_to_ptr.hbm [resolvable:$true] %s286
          %s288 = sshll.u32 [#allocation2], 4
          %s289 = int_to_ptr.vmem [resolvable:$true] %s288
          %294 = dma.hbm_to_vmem [thread:$0]  %s287, 4096, %s289, [#allocation3], 256, 256, 16
        $region20: #{tpu_custom_call.1} parent=11 // pred_fallthru
          _
        // Predicated region
        $region21: #{tpu_custom_call.1} parent=11 // pred_check
          %p295 = pneg %p207
        $region22: #{tpu_custom_call.1} parent=11 // pred_check_branch
          %297 = sbr.rel (%p295) target = $region24
        $region23: #{tpu_custom_call.1} parent=11 // pred_region
          _
        $region24: #{tpu_custom_call.1} parent=11 // pred_fallthru
          _
      $region12: #{tpu_custom_call.1} parent=5 // pred_fallthru
        _
      %p298 = scmp.lt.s32.totalorder %s22, 2
      // Predicated region
      $region25: #{tpu_custom_call.1} parent=5 // pred_check
        %p299 = pneg %p298
      $region26: #{tpu_custom_call.1} parent=5 // pred_check_branch
        %301 = sbr.rel (%p299) target = $region28
      $region27: #{tpu_custom_call.1} parent=5 // pred_region
        // Predicated region
        $region29: #{tpu_custom_call.1} parent=27 // pred_check
          %p302 = pneg %p56
        $region30: #{tpu_custom_call.1} parent=27 // pred_check_branch
          %304 = sbr.rel (%p302) target = $region32
        $region31: #{tpu_custom_call.1} parent=27 // pred_region
          %s305 = smul.u32 2, %s30
          %p306 = scmp.lt.s32.totalorder %s29, 1
          %s307 = scalar_select %p306, %s29, 1
          %p308 = scmp.lt.s32.totalorder %s305, 1
          %s309 = scalar_select %p308, %s305, 1
          %s310 = smul.addr %s307, 2
          %s311 = sadd.s32 %s309, %s310
          %s312 = smul.addr %s311, 8
          %s313 = scalar_lea.vmem %s0, %s312
          %s314 = smul.u32 2, %s30
        $region32: #{tpu_custom_call.1} parent=27 // pred_fallthru
          _
        // Predicated region
        $region33: #{tpu_custom_call.1} parent=27 // pred_check
          %p315 = pneg %p84
        $region34: #{tpu_custom_call.1} parent=27 // pred_check_branch
          %317 = sbr.rel (%p315) target = $region36
        $region35: #{tpu_custom_call.1} parent=27 // pred_region
          %p318 = scmp.lt.s32.totalorder %s29, 1
          %s319 = scalar_select %p318, %s29, 1
          %p320 = scmp.lt.s32.totalorder %s30, 0
          %s321 = scalar_select %p320, %s30, 0
          %s322 = sadd.s32 %s321, %s319
          %s323 = smul.addr %s322, 4
          %s324 = scalar_lea.vmem %s1, %s323
        $region36: #{tpu_custom_call.1} parent=27 // pred_fallthru
          _
        // Predicated region
        $region37: #{tpu_custom_call.1} parent=27 // pred_check
          %p325 = pneg %p112
        $region38: #{tpu_custom_call.1} parent=27 // pred_check_branch
          %327 = sbr.rel (%p325) target = $region40
        $region39: #{tpu_custom_call.1} parent=27 // pred_region
          %s328 = smul.u32 2, %s30
          %p329 = scmp.lt.s32.totalorder %s29, 1
          %s330 = scalar_select %p329, %s29, 1
          %p331 = scmp.lt.s32.totalorder %s328, 1
          %s332 = scalar_select %p331, %s328, 1
          %s333 = smul.addr %s330, 2
          %s334 = sadd.s32 %s332, %s333
          %s335 = smul.addr %s334, 8
          %s336 = scalar_lea.vmem %s2, %s335
          %s337 = smul.u32 2, %s30
        $region40: #{tpu_custom_call.1} parent=27 // pred_fallthru
          _
        // Predicated region
        $region41: #{tpu_custom_call.1} parent=27 // pred_check
          %p338 = pneg %p138
        $region42: #{tpu_custom_call.1} parent=27 // pred_check_branch
          %340 = sbr.rel (%p338) target = $region44
        $region43: #{tpu_custom_call.1} parent=27 // pred_region
          %p341 = scmp.lt.s32.totalorder %s29, 1
          %s342 = scalar_select %p341, %s29, 1
          %s343 = smul.addr %s342, 2
          %s344 = scalar_lea.vmem %s3, %s343
        $region44: #{tpu_custom_call.1} parent=27 // pred_fallthru
          _
      $region28: #{tpu_custom_call.1} parent=5 // pred_fallthru
        _
      %p345 = scmp.le.s32.totalorder 1, %s22
      %p346 = scmp.lt.s32.totalorder %s22, 3
      %p347 = pnand %p345, %p346
      %p348 = pneg %p347
      // Predicated region
      $region45: #{tpu_custom_call.1} parent=5 // pred_check
        _
      $region46: #{tpu_custom_call.1} parent=5 // pred_check_branch
        %350 = sbr.rel (%p347) target = $region48
      $region47: #{tpu_custom_call.1} parent=5 // pred_region
        %s351 = ssub.s32 %s22, 1
        // Predicated region
        $region49: #{tpu_custom_call.1} parent=47 // pred_check
          %p352 = pneg %p186
        $region50: #{tpu_custom_call.1} parent=47 // pred_check_branch
          %354 = sbr.rel (%p352) target = $region52
        $region51: #{tpu_custom_call.1} parent=47 // pred_region
          %356 = dma.done [#allocation3], 4096
        $region52: #{tpu_custom_call.1} parent=47 // pred_fallthru
          _
        %s357 = smul.u32 2, %s32
        %p358 = scmp.lt.s32.totalorder %s31, 1
        %s359 = scalar_select %p358, %s31, 1
        %p360 = scmp.lt.s32.totalorder %s357, 1
        %s361 = scalar_select %p360, %s357, 1
        %s362 = smul.addr %s359, 2
        %s363 = sadd.s32 %s361, %s362
        %s364 = smul.addr %s363, 8
        %s365 = scalar_lea.vmem %s0, %s364
        %p366 = pneg %p62
        %p367 = pneg %p59
        %p368 = scmp.lt.s32.totalorder %s31, 1
        %s369 = scalar_select %p368, %s31, 1
        %p370 = scmp.lt.s32.totalorder %s32, 0
        %s371 = scalar_select %p370, %s32, 0
        %s372 = sadd.s32 %s371, %s369
        %s373 = smul.addr %s372, 4
        %s374 = scalar_lea.vmem %s1, %s373
        %p375 = pneg %p90
        %p376 = pneg %p87
        %s377 = smul.u32 2, %s32
        %p378 = scmp.lt.s32.totalorder %s31, 1
        %s379 = scalar_select %p378, %s31, 1
        %p380 = scmp.lt.s32.totalorder %s377, 1
        %s381 = scalar_select %p380, %s377, 1
        %s382 = smul.addr %s379, 2
        %s383 = sadd.s32 %s381, %s382
        %s384 = smul.addr %s383, 8
        %s385 = scalar_lea.vmem %s2, %s384
        %p386 = pneg %p118
        %p387 = pneg %p115
        %p388 = scmp.lt.s32.totalorder %s31, 1
        %s389 = scalar_select %p388, %s31, 1
        %s390 = smul.addr %s389, 2
        %s391 = scalar_lea.vmem %s3, %s390
        %p392 = pneg %p144
        %p393 = pneg %p141
        %p394 = pneg %p165
        %p395 = pneg %p162
        %p396 = pneg %p186
        %p397 = pneg %p183
        %p398 = pneg %p207
        %p399 = pneg %p204
        %p400 = pneg %p235
        %p401 = pneg %p232
        %s402 = sand.u32 %s222, 1
        %s403 = scalar_lea.sflag [#allocation4], %s402
        %s404 = sand.u32 %s222, 1
        %s405 = smul.addr %s404, 16
        %s406 = scalar_lea.vmem [#allocation5], %s405
        %p407 = pneg %p263
        %p408 = pneg %p260
        %s409 = sand.u32 %s250, 1
        %s410 = scalar_lea.sflag [#allocation7], %s409
        %s411 = sand.u32 %s250, 1
        %s412 = smul.addr %s411, 16
        %s413 = scalar_lea.vmem [#allocation6], %s412
        %s414 = smul.u32 2, %s32
        %p415 = scmp.lt.s32.totalorder %s31, 1
        %s416 = scalar_select %p415, %s31, 1
        %p417 = scmp.lt.s32.totalorder %s414, 1
        %s418 = scalar_select %p417, %s414, 1
        %s419 = smul.addr %s416, 2
        %s420 = sadd.s32 %s418, %s419
        %s421 = smul.addr %s420, 8
        %s422 = scalar_lea.vmem %s0, %s421
        %s423 = smul.u32 2, %s32
        %p424 = scmp.lt.s32.totalorder %s31, 1
        %s425 = scalar_select %p424, %s31, 1
        %p426 = scmp.lt.s32.totalorder %s32, 0
        %s427 = scalar_select %p426, %s32, 0
        %s428 = sadd.s32 %s427, %s425
        %s429 = smul.addr %s428, 4
        %s430 = scalar_lea.vmem %s1, %s429
        %s431 = smul.u32 2, %s32
        %p432 = scmp.lt.s32.totalorder %s31, 1
        %s433 = scalar_select %p432, %s31, 1
        %p434 = scmp.lt.s32.totalorder %s431, 1
        %s435 = scalar_select %p434, %s431, 1
        %s436 = smul.addr %s433, 2
        %s437 = sadd.s32 %s435, %s436
        %s438 = smul.addr %s437, 8
        %s439 = scalar_lea.vmem %s2, %s438
        %s440 = smul.u32 2, %s32
        %p441 = scmp.lt.s32.totalorder %s31, 1
        %s442 = scalar_select %p441, %s31, 1
        %s443 = smul.addr %s442, 2
        %s444 = scalar_lea.vmem %s3, %s443
        %s445 = smul.u32 2, %s32
        %s446 = smul.u32 2, %s32
        %v447 = vld [vmem:[%s422] sm:$0xff]
        %v448 = vld [vmem:[%s422 + $0x8] sm:$0xff]
        %v449 = vld [vmem:[%s430] sm:$0xf]
        %vm452 = vcmask 1043456
        %v453 = vrot.slane %v447, 4
        %v454 = vrot.slane %v448, 4
        %v455 = vsel %vm452, %v453, %v454
        %v458 = vsel %vm452, %v449, %v453
        %v459 = vld [vmem:[%s439] sm:$0xff]
        %v460 = vld [vmem:[%s439 + $0x8] sm:$0xff]
        %vm462 = vcmask 1045504
        %v463 = vrot.slane %v458, 2
        %v464 = vrot.slane %v455, 2
        %v465 = vsel %vm462, %v463, %v464
        %v466 = vrot.slane %v454, 2
        %v467 = vsel %vm462, %v464, %v466
        %468 = vrot.lane.b32.xlu0 %v465, 4
        %v469 = vpop.permute.xlu0 %468
        %470 = vrot.lane.b32.xlu0 %v467, 4
        %v471 = vpop.permute.xlu0 %470
        %474 = vrot.lane.b32.xlu0 %v447, 8
        %v475 = vpop.permute.xlu0 %474
        %476 = vrot.lane.b32.xlu0 %v448, 8
        %v477 = vpop.permute.xlu0 %476
        %482 = vrot.lane.b32.xlu0 %v459, 12
        %v483 = vpop.permute.xlu0 %482
        %484 = vrot.lane.b32.xlu0 %v460, 12
        %v485 = vpop.permute.xlu0 %484
        %vm488 = vcmask 31744
        %v489 = vsel %vm488, %v458, %v469
        %v490 = vsel %vm488, %v455, %v471
        %vm491 = vcmask 64512
        %v492 = vsel %vm491, %v489, %v475
        %v493 = vsel %vm491, %v490, %v477
        %vm494 = vcmask 97280
        %v495 = vsel %vm494, %v492, %v483
        %v496 = vsel %vm494, %v493, %v485
        %v497 = vld [vmem:[%s4] sm:$0xff]
        %v498 = vld [vmem:[%s4 + $0x8] sm:$0xff]
        %v499 = vld [vmem:[%s4 + $0x10] sm:$0x7f]
        %v500 = vld [vmem:[%s4 + $0x18] sm:$0x7f]
        %v501 = vld [vmem:[%s444] sm:$0x3]
        %v503 = vperm.slane %v501, 0
        %v504 = vperm.slane %v501, 1
        %vm507 = vcmask 121856
        %v509 = vsel %vm507, %v495, 0
        %v512 = vsel %vm507, %v496, 0
        %vm514 = vcmask 1046528
        %v516 = vsel %vm514, %v499, 0
        %v519 = vsel %vm514, %v500, 0
        %521 = vmatpush.msra.mxu0 0.0
        %522 = vmatpush.msra.mxu0 0.0
        %523 = vmatpush.msra.mxu0 0.0
        %524 = vmatpush.msra.mxu0 0.0
        %525 = vmatpush.msra.mxu0 0.0
        %526 = vmatpush.msra.mxu0 0.0
        %527 = vmatpush.msra.mxu0 0.0
        %528 = vmatpush.msra.mxu0 0.0
        %529 = vmatpush.msra.mxu0 0.0
        %530 = vmatpush.msra.mxu0 0.0
        %531 = vmatpush.msra.mxu0 0.0
        %532 = vmatpush.msra.mxu0 0.0
        %533 = vmatpush.msra.mxu0 0.0
        %534 = vmatpush.msra.mxu0 0.0
        %535 = vmatpush.msra.mxu0 %v516
        %536 = vmatpush.msra.mxu0 %v497
        %537 = vmatmul.f32.gmra.mxu0 %v509
        %v538 = vpop.f32.mrf.mxu0
        %v539 = vadd.f32 %v503, %v538
        %540 = vmatmul.f32.gmra.mxu0 %v512
        %v541 = vpop.f32.mrf.mxu0
        %v542 = vadd.f32 %v503, %v541
        %543 = vdwg.mxu0
        %544 = vmatpush.msra.mxu0 0.0
        %545 = vmatpush.msra.mxu0 0.0
        %546 = vmatpush.msra.mxu0 0.0
        %547 = vmatpush.msra.mxu0 0.0
        %548 = vmatpush.msra.mxu0 0.0
        %549 = vmatpush.msra.mxu0 0.0
        %550 = vmatpush.msra.mxu0 0.0
        %551 = vmatpush.msra.mxu0 0.0
        %552 = vmatpush.msra.mxu0 0.0
        %553 = vmatpush.msra.mxu0 0.0
        %554 = vmatpush.msra.mxu0 0.0
        %555 = vmatpush.msra.mxu0 0.0
        %556 = vmatpush.msra.mxu0 0.0
        %557 = vmatpush.msra.mxu0 0.0
        %558 = vmatpush.msra.mxu0 %v519
        %559 = vmatpush.msra.mxu0 %v498
        %560 = vmatmul.f32.gmra.mxu0 %v509
        %v561 = vpop.f32.mrf.mxu0
        %v562 = vadd.f32 %v504, %v561
        %563 = vmatmul.f32.gmra.mxu0 %v512
        %v564 = vpop.f32.mrf.mxu0
        %v565 = vadd.f32 %v504, %v564
        %566 = vdwg.mxu0
        %v567 = vtanh.pop %v539
        %v568 = vtanh.pop %v542
        %v569 = vxor.u32 %v562, 2147483648
        %v570 = vxor.u32 %v565, 2147483648
        %v571 = vmul.f32 %v569, 1.442695
        %v572 = vpow.pop %v571
        %v573 = vmul.f32 %v570, 1.442695
        %v574 = vpow.pop %v573
        %v575 = vadd.f32 %v572, 1.0
        %v576 = vadd.f32 %v574, 1.0
        %v577 = vrcp.pop %v575
        %v578 = vmul.f32 %v575, %v577
        %v579 = vsub.f32 1.0, %v578
        %v580 = vmul.f32 %v577, %v579
        %v581 = vadd.f32 %v577, %v580
        %vm582 = vweird.f32 %v575
        %vm583 = vweird.f32 %v577
        %vm584 = vmor %vm582, %vm583
        %v585 = vsel %vm584, %v577, %v581
        %v586 = vand.u32 2147483647, %v575
        %vm587 = vcmp.eq.f32.partialorder %v586, 8.507059e+37
        %v588 = vand.u32 %v575, 2147483648
        %v589 = vor.u32 1.1754944e-38, %v588
        %v590 = vsel %vm587, %v589, %v585
        %v591 = vmul.f32 1.0, %v590
        %v592 = vrcp.pop %v576
        %v593 = vmul.f32 %v576, %v592
        %v594 = vsub.f32 1.0, %v593
        %v595 = vmul.f32 %v592, %v594
        %v596 = vadd.f32 %v592, %v595
        %vm597 = vweird.f32 %v576
        %vm598 = vweird.f32 %v592
        %vm599 = vmor %vm597, %vm598
        %v600 = vsel %vm599, %v592, %v596
        %v601 = vand.u32 2147483647, %v576
        %vm602 = vcmp.eq.f32.partialorder %v601, 8.507059e+37
        %v603 = vand.u32 %v576, 2147483648
        %v604 = vor.u32 1.1754944e-38, %v603
        %v605 = vsel %vm602, %v604, %v600
        %v606 = vmul.f32 1.0, %v605
        %v607 = vmul.f32 %v567, %v591
        %v608 = vmul.f32 %v568, %v606
        %v609 = vld [vmem:[#allocation2] sm:$0xff]
        %v610 = vld [vmem:[#allocation2 + $0x8] sm:$0xff]
        %v611 = vld [vmem:[#allocation2 + $0x10] sm:$0xff]
        %v612 = vld [vmem:[#allocation2 + $0x18] sm:$0xff]
        %v613 = vld [vmem:[#allocation2 + $0x20] sm:$0xff]
        %v614 = vld [vmem:[#allocation2 + $0x28] sm:$0xff]
        %v615 = vld [vmem:[#allocation2 + $0x30] sm:$0xff]
        %v616 = vld [vmem:[#allocation2 + $0x38] sm:$0xff]
        %v617 = vld [vmem:[#allocation2 + $0x40] sm:$0xff]
        %v618 = vld [vmem:[#allocation2 + $0x48] sm:$0xff]
        %v619 = vld [vmem:[#allocation2 + $0x50] sm:$0xff]
        %v620 = vld [vmem:[#allocation2 + $0x58] sm:$0xff]
        %v621 = vld [vmem:[#allocation2 + $0x60] sm:$0xff]
        %v622 = vld [vmem:[#allocation2 + $0x68] sm:$0xff]
        %v623 = vld [vmem:[#allocation2 + $0x70] sm:$0xff]
        %v624 = vld [vmem:[#allocation2 + $0x78] sm:$0xff]
        %v625 = vld [vmem:[#allocation2 + $0x80] sm:$0xff]
        %v626 = vld [vmem:[#allocation2 + $0x88] sm:$0xff]
        %v627 = vld [vmem:[#allocation2 + $0x90] sm:$0xff]
        %v628 = vld [vmem:[#allocation2 + $0x98] sm:$0xff]
        %v629 = vld [vmem:[#allocation2 + $0xa0] sm:$0xff]
        %v630 = vld [vmem:[#allocation2 + $0xa8] sm:$0xff]
        %v631 = vld [vmem:[#allocation2 + $0xb0] sm:$0xff]
        %v632 = vld [vmem:[#allocation2 + $0xb8] sm:$0xff]
        %v633 = vld [vmem:[#allocation2 + $0xc0] sm:$0xff]
        %v634 = vld [vmem:[#allocation2 + $0xc8] sm:$0xff]
        %v635 = vld [vmem:[#allocation2 + $0xd0] sm:$0xff]
        %v636 = vld [vmem:[#allocation2 + $0xd8] sm:$0xff]
        %v637 = vld [vmem:[#allocation2 + $0xe0] sm:$0xff]
        %v638 = vld [vmem:[#allocation2 + $0xe8] sm:$0xff]
        %v639 = vld [vmem:[#allocation2 + $0xf0] sm:$0xff]
        %v640 = vld [vmem:[#allocation2 + $0xf8] sm:$0xff]
        %v641 = vld [vmem:[%s6] sm:$0x3]
        %v643 = vperm.slane %v641, 0
        %v644 = vperm.slane %v641, 1
        %647 = vmatpush.msra.mxu0 %v639
        %648 = vmatpush.msra.mxu0 %v637
        %649 = vmatpush.msra.mxu0 %v635
        %650 = vmatpush.msra.mxu0 %v633
        %651 = vmatpush.msra.mxu0 %v631
        %652 = vmatpush.msra.mxu0 %v629
        %653 = vmatpush.msra.mxu0 %v627
        %654 = vmatpush.msra.mxu0 %v625
        %655 = vmatpush.msra.mxu0 %v623
        %656 = vmatpush.msra.mxu0 %v621
        %657 = vmatpush.msra.mxu0 %v619
        %658 = vmatpush.msra.mxu0 %v617
        %659 = vmatpush.msra.mxu0 %v615
        %660 = vmatpush.msra.mxu0 %v613
        %661 = vmatpush.msra.mxu0 %v611
        %662 = vmatpush.msra.mxu0 %v609
        %663 = vmatmul.f32.gmra.mxu0 %v607
        %v664 = vpop.f32.mrf.mxu0
        %v665 = vadd.f32 %v643, %v664
        %666 = vmatmul.f32.gmra.mxu0 %v608
        %v667 = vpop.f32.mrf.mxu0
        %v668 = vadd.f32 %v643, %v667
        %669 = vdwg.mxu0
        %670 = vmatpush.msra.mxu0 %v640
        %671 = vmatpush.msra.mxu0 %v638
        %672 = vmatpush.msra.mxu0 %v636
        %673 = vmatpush.msra.mxu0 %v634
        %674 = vmatpush.msra.mxu0 %v632
        %675 = vmatpush.msra.mxu0 %v630
        %676 = vmatpush.msra.mxu0 %v628
        %677 = vmatpush.msra.mxu0 %v626
        %678 = vmatpush.msra.mxu0 %v624
        %679 = vmatpush.msra.mxu0 %v622
        %680 = vmatpush.msra.mxu0 %v620
        %681 = vmatpush.msra.mxu0 %v618
        %682 = vmatpush.msra.mxu0 %v616
        %683 = vmatpush.msra.mxu0 %v614
        %684 = vmatpush.msra.mxu0 %v612
        %685 = vmatpush.msra.mxu0 %v610
        %686 = vmatmul.f32.gmra.mxu0 %v607
        %v687 = vpop.f32.mrf.mxu0
        %v688 = vadd.f32 %v644, %v687
        %689 = vmatmul.f32.gmra.mxu0 %v608
        %v690 = vpop.f32.mrf.mxu0
        %v691 = vadd.f32 %v644, %v690
        %692 = vdwg.mxu0
        %693 = vst [vmem:[%s406] sm:$0xff] %v665
        %694 = vst [vmem:[%s406 + $0x8] sm:$0xff] %v668
        %v695 = vsel %vm488, %v447, 0.0
        %v696 = vsel %vm488, %v448, 0.0
        %v697 = vadd.f32 %v688, %v695
        %v698 = vadd.f32 %v691, %v696
        %699 = vst [vmem:[%s413] sm:$0xff] %v697
        %700 = vst [vmem:[%s413 + $0x8] sm:$0xff] %v698
        %s701 = sand.u32 %s222, 1
        %s702 = scalar_lea.sflag [#allocation4], %s701
        %s703 = sand.u32 %s222, 1
        %s704 = smul.addr %s703, 16
        %s705 = scalar_lea.vmem [#allocation5], %s704
        %s706 = sand.u32 %s250, 1
        %s707 = scalar_lea.sflag [#allocation7], %s706
        %s708 = sand.u32 %s250, 1
        %s709 = smul.addr %s708, 16
        %s710 = scalar_lea.vmem [#allocation6], %s709
        // Predicated region
        $region53: #{tpu_custom_call.1} parent=47 // pred_check
          %p711 = pneg %p232
        $region54: #{tpu_custom_call.1} parent=47 // pred_check_branch
          %713 = sbr.rel (%p711) target = $region56
        $region55: #{tpu_custom_call.1} parent=47 // pred_region
          %s714 = smul.u32 2, %s32
          %716 = vsyncadd %s702, 0
          %s717 = smul.addr %s31, 2
          %s718 = sadd.s32 %s714, %s717
          %s719 = smul.addr %s718, 8
          %s720 = scalar_lea.hbm %s7, %s719
          %s721 = sshll.u32 %s705, 4
          %s722 = int_to_ptr.vmem [resolvable:$true] %s721
          %s723 = sshll.u32 %s720, 4
          %s724 = int_to_ptr.hbm [resolvable:$true] %s723
          %729 = dma.vmem_to_hbm [thread:$0]  %s722, 256, %s724, %s702, 128, 128, 8
        $region56: #{tpu_custom_call.1} parent=47 // pred_fallthru
          _
        // Predicated region
        $region57: #{tpu_custom_call.1} parent=47 // pred_check
          %p730 = pneg %p260
        $region58: #{tpu_custom_call.1} parent=47 // pred_check_branch
          %732 = sbr.rel (%p730) target = $region60
        $region59: #{tpu_custom_call.1} parent=47 // pred_region
          %s733 = smul.u32 2, %s32
          %735 = vsyncadd %s707, 0
          %s736 = smul.addr %s31, 2
          %s737 = sadd.s32 %s733, %s736
          %s738 = smul.addr %s737, 8
          %s739 = scalar_lea.hbm %s8, %s738
          %s740 = sshll.u32 %s710, 4
          %s741 = int_to_ptr.vmem [resolvable:$true] %s740
          %s742 = sshll.u32 %s739, 4
          %s743 = int_to_ptr.hbm [resolvable:$true] %s742
          %748 = dma.vmem_to_hbm [thread:$0]  %s741, 256, %s743, %s707, 128, 128, 8
        $region60: #{tpu_custom_call.1} parent=47 // pred_fallthru
          _
      $region48: #{tpu_custom_call.1} parent=5 // pred_fallthru
        _
      %p749 = scmp.le.s32.totalorder 2, %s22
      // Predicated region
      $region61: #{tpu_custom_call.1} parent=5 // pred_check
        %p750 = pneg %p749
      $region62: #{tpu_custom_call.1} parent=5 // pred_check_branch
        %752 = sbr.rel (%p750) target = $region64
      $region63: #{tpu_custom_call.1} parent=5 // pred_region
        %s753 = ssub.s32 %s22, 2
        // Predicated region
        $region65: #{tpu_custom_call.1} parent=63 // pred_check
          %p754 = pneg %p238
        $region66: #{tpu_custom_call.1} parent=63 // pred_check_branch
          %756 = sbr.rel (%p754) target = $region68
        $region67: #{tpu_custom_call.1} parent=63 // pred_region
          %s757 = sand.u32 %s223, 1
          %s758 = scalar_lea.sflag [#allocation4], %s757
          %s759 = sand.u32 %s223, 1
          %s760 = smul.addr %s759, 16
          %s761 = scalar_lea.vmem [#allocation5], %s760
          %763 = dma.done %s758, 256
        $region68: #{tpu_custom_call.1} parent=63 // pred_fallthru
          _
        // Predicated region
        $region69: #{tpu_custom_call.1} parent=63 // pred_check
          %p764 = pneg %p266
        $region70: #{tpu_custom_call.1} parent=63 // pred_check_branch
          %766 = sbr.rel (%p764) target = $region72
        $region71: #{tpu_custom_call.1} parent=63 // pred_region
          %s767 = sand.u32 %s251, 1
          %s768 = scalar_lea.sflag [#allocation7], %s767
          %s769 = sand.u32 %s251, 1
          %s770 = smul.addr %s769, 16
          %s771 = scalar_lea.vmem [#allocation6], %s770
          %773 = dma.done %s768, 256
        $region72: #{tpu_custom_call.1} parent=63 // pred_fallthru
          _
      $region64: #{tpu_custom_call.1} parent=5 // pred_fallthru
        _
    $region6: #{tpu_custom_call.1} parent=1 // loop_footer
      %s26 = sadd.s32 1, %s22
    $region7: #{tpu_custom_call.1} parent=1 // loop_footer_branch
      %21 = sbr.rel target = $region3
    $region8: #{tpu_custom_call.1} parent=1 // loop_exit
      _
    %774 = vsyncpa [#allocation3], 1
    %s775 = scalar_lea.sflag [#allocation3], 1
    %776 = vsyncpa %s775, 1
    %777 = vsyncpa [#allocation4], 1
    %s778 = scalar_lea.sflag [#allocation4], 1
    %779 = vsyncpa %s778, 1
    %780 = vsyncpa [#allocation7], 1
    %s781 = scalar_lea.sflag [#allocation7], 1
    %782 = vsyncpa %s781, 1

</llo_original>
